<compile_context>
chip_gen: v5e
topology: v5e:2x2
jax: 0.10.0
libtpu: 0.0.40
codegen_flags: <defaults>
</compile_context>

<pallas_src>
import jax
import jax.numpy as jnp
from jax.experimental import pallas as pl
from jax.experimental.pallas import tpu as pltpu

# ----- small, deterministic config (consistent with the module's forward) -----
BATCH = 2
IMG = 32           # must be a multiple of PATCH
PATCH = 8          # patch-embedding kernel/stride
DIM = 128          # channel width (256 in the reference; 128 keeps the demo small)
DEPTH = 2          # mixer depth (15 in the reference, shrunk for the demo)
KSIZE = 3          # depthwise kernel size (padding="same")
N_CLASSES = 6
BN_EPS = 1e-5

HP = IMG // PATCH
WP = IMG // PATCH
SPATIAL = HP * WP                 # flattened spatial rows of ONE sample
K_PATCH = PATCH * PATCH
KK = KSIZE * KSIZE
PAD = KSIZE // 2

assert IMG % PATCH == 0
assert SPATIAL % 8 == 0           # keeps the (SPATIAL, DIM) tile sublane-aligned

# static (tap index, flat row offset) pairs of the 3x3 "same" depthwise conv
_TAPS = [(ky * KSIZE + kx, (ky - PAD) * WP + (kx - PAD))
         for ky in range(KSIZE) for kx in range(KSIZE)]
_CENTER = KK // 2                 # tap with offset 0


def _gelu(x):
    # tanh-approximate GELU (see TODO above)
    c = 0.7978845608028654  # sqrt(2/pi)
    return 0.5 * x * (1.0 + jnp.tanh(c * (x + 0.044715 * x * x * x)))


# ---------------------------------------------------------------------------
# Kernel: full ConvMixer (include_top=False) + spatial mean, for ONE
#         (colour-stream, sample) per grid step.
#   feature layout: (SPATIAL, DIM) = (16, 128) -> lane-dense, sublane-aligned.
# ---------------------------------------------------------------------------
def _mixer_kernel(patches_ref, embed_w_ref, embed_v_ref,
                  tap_w_ref, pw_w_ref, blk_v_ref, pooled_ref):
    # ---- patch embedding: bf16 MXU matmul + bias + GELU + folded BN (f32) ----
    ev = embed_v_ref[...]                                   # (3, DIM): bias, bn scale, bn shift
    y = jnp.dot(patches_ref[...], embed_w_ref[...],
                preferred_element_type=jnp.float32)         # (SPATIAL, DIM) f32
    feat = _gelu(y + ev[0:1, :]) * ev[1:2, :] + ev[2:3, :]

    # ---- depth x [ Residual(DWConv -> GELU -> BN) -> Conv1x1 -> GELU -> BN ] ----
    for d in range(DEPTH):
        v = blk_v_ref[d]                                    # (6, DIM): dw b/s/t, pw b/s/t

        # depthwise 3x3 "same": each tap is an XLU row-rotation times a
        # pre-folded (boundary-mask * per-channel tap weight) tensor.
        acc = feat * tap_w_ref[d, _CENTER]                  # center tap, no roll
        for t, off in _TAPS:
            if off == 0:
                continue
            acc = acc + (pltpu.roll(feat, shift=(-off) % SPATIAL, axis=0)
                         * tap_w_ref[d, t])

        y = _gelu(acc + v[0:1, :]) * v[1:2, :] + v[2:3, :]
        feat = y + feat                                     # residual add

        # pointwise 1x1 conv = bf16 matmul over channels (MXU)
        y = jnp.dot(feat.astype(jnp.bfloat16), pw_w_ref[d],
                    preferred_element_type=jnp.float32)
        feat = _gelu(y + v[3:4, :]) * v[4:5, :] + v[5:6, :]

    # ---- AdaptiveAvgPool2d((1,1)) for this sample: mean over spatial rows ----
    pooled_ref[...] = jnp.mean(feat, axis=0, keepdims=True).astype(pooled_ref.dtype)


def run_mixers(patches, p):
    """patches: (3, BATCH, SPATIAL, p*p) bf16 -> pooled features (3, BATCH, 1, DIM) f32."""
    return pl.pallas_call(
        _mixer_kernel,
        out_shape=jax.ShapeDtypeStruct((3, BATCH, 1, DIM), jnp.float32),
        grid=(3, BATCH),
        in_specs=[
            pl.BlockSpec((None, None, SPATIAL, K_PATCH), lambda s, n: (s, n, 0, 0)),
            pl.BlockSpec((None, K_PATCH, DIM), lambda s, n: (s, 0, 0)),
            pl.BlockSpec((None, 3, DIM), lambda s, n: (s, 0, 0)),
            pl.BlockSpec((None, DEPTH, KK, SPATIAL, DIM), lambda s, n: (s, 0, 0, 0, 0)),
            pl.BlockSpec((None, DEPTH, DIM, DIM), lambda s, n: (s, 0, 0, 0)),
            pl.BlockSpec((None, DEPTH, 6, DIM), lambda s, n: (s, 0, 0, 0)),
        ],
        out_specs=pl.BlockSpec((None, None, 1, DIM), lambda s, n: (s, n, 0, 0)),
        compiler_params=pltpu.CompilerParams(
            dimension_semantics=("parallel", "parallel")),  # 6 even steps -> 2 TCs on v7x
    )(patches, p["embed_w"], p["embed_v"], p["tap_w"], p["pw_w"], p["blk_v"])


# ---------------------------------------------------------------------------
# parameter init (deterministic, synthetic) — per-stream params stacked on axis 0
# ---------------------------------------------------------------------------
def _bn_fold(key, c):
    k1, k2, k3, k4 = jax.random.split(key, 4)
    gamma = 1.0 + 0.1 * jax.random.normal(k1, (c,), jnp.float32)
    beta = 0.1 * jax.random.normal(k2, (c,), jnp.float32)
    mean = 0.1 * jax.random.normal(k3, (c,), jnp.float32)
    var = jax.random.uniform(k4, (c,), jnp.float32, 0.5, 1.5)
    scale = gamma / jnp.sqrt(var + BN_EPS)
    shift = beta - mean * scale
    return scale, shift


def _tap_masks():
    """(KK, SPATIAL) f32 validity masks of the zero-padded 3x3 conv for ONE sample."""
    r = jnp.arange(SPATIAL)
    yy, xx = r // WP, r % WP
    masks = []
    for ky in range(KSIZE):
        for kx in range(KSIZE):
            dy, dx = ky - PAD, kx - PAD
            valid = ((yy + dy >= 0) & (yy + dy < HP) &
                     (xx + dx >= 0) & (xx + dx < WP))
            masks.append(valid.astype(jnp.float32))
    return jnp.stack(masks, axis=0)


def _init_single_mixer(key, masks):
    def nxt():
        nonlocal key
        key, sub = jax.random.split(key)
        return sub

    w_embed = 0.1 * jax.random.normal(nxt(), (DIM, 1, PATCH, PATCH), jnp.float32)
    embed_w = w_embed.reshape(DIM, K_PATCH).T.astype(jnp.bfloat16)    # (p*p, DIM) MXU operand
    embed_b = 0.05 * jax.random.normal(nxt(), (DIM,), jnp.float32)
    s0, t0 = _bn_fold(nxt(), DIM)
    embed_v = jnp.stack([embed_b, s0, t0], axis=0)                    # (3, DIM) f32

    tap_w, pw_w, blk_v = [], [], []
    for _ in range(DEPTH):
        w_dw = 0.1 * jax.random.normal(nxt(), (DIM, 1, KSIZE, KSIZE), jnp.float32)
        b_dw = 0.05 * jax.random.normal(nxt(), (DIM,), jnp.float32)
        s_dw, t_dw = _bn_fold(nxt(), DIM)
        w_pw = 0.1 * jax.random.normal(nxt(), (DIM, DIM, 1, 1), jnp.float32)
        b_pw = 0.05 * jax.random.normal(nxt(), (DIM,), jnp.float32)
        s_pw, t_pw = _bn_fold(nxt(), DIM)
        dw_flat = w_dw.reshape(DIM, KK).T                             # (k*k, DIM)
        # pre-fold the zero-padding boundary mask into the per-tap weights
        tap_w.append(masks[:, :, None] * dw_flat[:, None, :])         # (KK, SPATIAL, DIM) f32
        pw_w.append(w_pw.reshape(DIM, DIM).T.astype(jnp.bfloat16))    # (C_in, C_out) bf16
        blk_v.append(jnp.stack([b_dw, s_dw, t_dw, b_pw, s_pw, t_pw], axis=0))
    return dict(embed_w=embed_w, embed_v=embed_v,
                tap_w=jnp.stack(tap_w), pw_w=jnp.stack(pw_w), blk_v=jnp.stack(blk_v))


def init_params(key):
    k_r, k_g, k_b, k_fw, k_fb = jax.random.split(key, 5)
    masks = _tap_masks()
    mixers = [_init_single_mixer(k, masks) for k in (k_r, k_g, k_b)]
    p = {name: jnp.stack([m[name] for m in mixers], axis=0)
         for name in ("embed_w", "embed_v", "tap_w", "pw_w", "blk_v")}
    p["fc_w"] = 0.1 * jax.random.normal(k_fw, (DIM, N_CLASSES), jnp.float32)
    p["fc_b"] = 0.05 * jax.random.normal(k_fb, (N_CLASSES,), jnp.float32)
    return p


# ---------------------------------------------------------------------------
# forward pass (patchify glue + tiny fusion head in plain XLA, hot path in Pallas)
# ---------------------------------------------------------------------------
def _patchify(x_nchw):
    n, _, h, w = x_nchw.shape
    hp, wp = h // PATCH, w // PATCH
    return (x_nchw[:, 0]
            .reshape(n, hp, PATCH, wp, PATCH)
            .transpose(0, 1, 3, 2, 4)
            .reshape(n, hp * wp, PATCH * PATCH))


def intermediate_fusion_forward(r, g, b, params):
    """InterMediateFusion.forward with use_attention=False (the default)."""
    patches = jnp.stack([_patchify(r), _patchify(g), _patchify(b)],
                        axis=0).astype(jnp.bfloat16)        # (3, N, SPATIAL, p*p)
    pooled = run_mixers(patches, params)                    # (3, N, 1, DIM) f32
    # fusion head: (r + g + b) -> AdaptiveAvgPool -> Linear.
    # pool-then-sum == sum-then-pool (mean is linear); the (N, 6) GEMM is tiny,
    # so it stays in plain XLA instead of a second pallas_call.
    fused = jnp.sum(pooled[:, :, 0, :], axis=0)             # (N, DIM)
    return fused @ params["fc_w"] + params["fc_b"]


if __name__ == "__main__":
    key = jax.random.PRNGKey(0)
    kp, kr, kg, kb = jax.random.split(key, 4)
    params = init_params(kp)
    r = jax.random.normal(kr, (BATCH, 1, IMG, IMG), jnp.float32)
    g = jax.random.normal(kg, (BATCH, 1, IMG, IMG), jnp.float32)
    b = jax.random.normal(kb, (BATCH, 1, IMG, IMG), jnp.float32)

    out = jax.jit(intermediate_fusion_forward)(r, g, b, params)
    jax.block_until_ready(out)
    assert out.shape == (BATCH, N_CLASSES) and out.dtype == jnp.float32
    print("KERNEL_OK")
</pallas_src>

<mosaic_0001>
module attributes {stable_mosaic.version = 11 : i64} {
  func.func @_mixer_kernel(%arg0: i32, %arg1: i32, %arg2: memref<1x1x16x64xbf16, #tpu.memory_space<vmem>>, %arg3: memref<1x64x128xbf16, #tpu.memory_space<vmem>>, %arg4: memref<1x3x128xf32, #tpu.memory_space<vmem>>, %arg5: memref<1x2x9x16x128xf32, #tpu.memory_space<vmem>>, %arg6: memref<1x2x128x128xbf16, #tpu.memory_space<vmem>>, %arg7: memref<1x2x6x128xf32, #tpu.memory_space<vmem>>, %arg8: memref<1x1x1x128xf32, #tpu.memory_space<vmem>>) attributes {dimension_semantics = [#tpu.dimension_semantics<parallel>, #tpu.dimension_semantics<parallel>], iteration_bounds = array<i64: 3, 2>, scalar_prefetch = 0 : i64, scratch_operands = 0 : i64, tpu.core_type = #tpu.core_type<tc>, window_params = [{transform_indices = @transform_0, window_bounds = array<i64: 1, 1, 16, 64>}, {transform_indices = @transform_1, window_bounds = array<i64: 1, 64, 128>}, {transform_indices = @transform_2, window_bounds = array<i64: 1, 3, 128>}, {transform_indices = @transform_3, window_bounds = array<i64: 1, 2, 9, 16, 128>}, {transform_indices = @transform_4, window_bounds = array<i64: 1, 2, 128, 128>}, {transform_indices = @transform_5, window_bounds = array<i64: 1, 2, 6, 128>}, {transform_indices = @transform_6, window_bounds = array<i64: 1, 1, 1, 128>}]} {
    %c0 = arith.constant 0 : index
    %c0_0 = arith.constant 0 : index
    %c0_1 = arith.constant 0 : index
    %0 = vector.load %arg4[%c0, %c0_0, %c0_1] : memref<1x3x128xf32, #tpu.memory_space<vmem>>, vector<1x3x128xf32>
    %1 = vector.shape_cast %0 : vector<1x3x128xf32> to vector<3x128xf32>
    %c0_2 = arith.constant 0 : index
    %c0_3 = arith.constant 0 : index
    %c0_4 = arith.constant 0 : index
    %c0_5 = arith.constant 0 : index
    %2 = vector.load %arg2[%c0_2, %c0_3, %c0_4, %c0_5] : memref<1x1x16x64xbf16, #tpu.memory_space<vmem>>, vector<1x1x16x64xbf16>
    %3 = vector.shape_cast %2 : vector<1x1x16x64xbf16> to vector<16x64xbf16>
    %c0_6 = arith.constant 0 : index
    %c0_7 = arith.constant 0 : index
    %c0_8 = arith.constant 0 : index
    %4 = vector.load %arg3[%c0_6, %c0_7, %c0_8] : memref<1x64x128xbf16, #tpu.memory_space<vmem>>, vector<1x64x128xbf16>
    %5 = vector.shape_cast %4 : vector<1x64x128xbf16> to vector<64x128xbf16>
    %cst = arith.constant dense<0.000000e+00> : vector<16x128xf32>
    %6 = tpu.matmul %3, %5, %cst {dimension_numbers = #tpu.dot_dimension_numbers<[1], [0], [0], [1], [0, 0, 1, 1], [], []>} : vector<16x64xbf16>, vector<64x128xbf16>, vector<16x128xf32> -> vector<16x128xf32>
    %7 = vector.extract_strided_slice %1 {offsets = [0, 0], sizes = [1, 128], strides = [1, 1]} : vector<3x128xf32> to vector<1x128xf32>
    %8 = vector.broadcast %7 : vector<1x128xf32> to vector<16x128xf32>
    %9 = arith.addf %6, %8 : vector<16x128xf32>
    %cst_9 = arith.constant 5.000000e-01 : f32
    %10 = vector.broadcast %cst_9 : f32 to vector<16x128xf32>
    %11 = arith.mulf %10, %9 : vector<16x128xf32>
    %cst_10 = arith.constant 4.471500e-02 : f32
    %12 = vector.broadcast %cst_10 : f32 to vector<16x128xf32>
    %13 = arith.mulf %12, %9 : vector<16x128xf32>
    %14 = arith.mulf %13, %9 : vector<16x128xf32>
    %15 = arith.mulf %14, %9 : vector<16x128xf32>
    %16 = arith.addf %9, %15 : vector<16x128xf32>
    %cst_11 = arith.constant 0.797884583 : f32
    %17 = vector.broadcast %cst_11 : f32 to vector<16x128xf32>
    %18 = arith.mulf %17, %16 : vector<16x128xf32>
    %19 = math.tanh %18 : vector<16x128xf32>
    %cst_12 = arith.constant 1.000000e+00 : f32
    %20 = vector.broadcast %cst_12 : f32 to vector<16x128xf32>
    %21 = arith.addf %20, %19 : vector<16x128xf32>
    %22 = arith.mulf %11, %21 : vector<16x128xf32>
    %23 = vector.extract_strided_slice %1 {offsets = [1, 0], sizes = [1, 128], strides = [1, 1]} : vector<3x128xf32> to vector<1x128xf32>
    %24 = vector.broadcast %23 : vector<1x128xf32> to vector<16x128xf32>
    %25 = arith.mulf %22, %24 : vector<16x128xf32>
    %26 = vector.extract_strided_slice %1 {offsets = [2, 0], sizes = [1, 128], strides = [1, 1]} : vector<3x128xf32> to vector<1x128xf32>
    %27 = vector.broadcast %26 : vector<1x128xf32> to vector<16x128xf32>
    %28 = arith.addf %25, %27 : vector<16x128xf32>
    %c0_13 = arith.constant 0 : index
    %c0_14 = arith.constant 0 : index
    %c0_15 = arith.constant 0 : index
    %c0_16 = arith.constant 0 : index
    %29 = vector.load %arg7[%c0_13, %c0_14, %c0_15, %c0_16] : memref<1x2x6x128xf32, #tpu.memory_space<vmem>>, vector<1x1x6x128xf32>
    %30 = vector.shape_cast %29 : vector<1x1x6x128xf32> to vector<6x128xf32>
    %c0_17 = arith.constant 0 : index
    %c0_18 = arith.constant 0 : index
    %c4 = arith.constant 4 : index
    %c0_19 = arith.constant 0 : index
    %c0_20 = arith.constant 0 : index
    %31 = vector.load %arg5[%c0_17, %c0_18, %c4, %c0_19, %c0_20] : memref<1x2x9x16x128xf32, #tpu.memory_space<vmem>>, vector<1x1x1x16x128xf32>
    %32 = vector.shape_cast %31 : vector<1x1x1x16x128xf32> to vector<16x128xf32>
    %33 = arith.mulf %28, %32 : vector<16x128xf32>
    %c5_i32 = arith.constant 5 : i32
    %34 = tpu.dynamic_rotate %28 by %c5_i32 dim 0 : vector<16x128xf32>, i32 -> vector<16x128xf32>
    %c0_21 = arith.constant 0 : index
    %c0_22 = arith.constant 0 : index
    %c0_23 = arith.constant 0 : index
    %c0_24 = arith.constant 0 : index
    %c0_25 = arith.constant 0 : index
    %35 = vector.load %arg5[%c0_21, %c0_22, %c0_23, %c0_24, %c0_25] : memref<1x2x9x16x128xf32, #tpu.memory_space<vmem>>, vector<1x1x1x16x128xf32>
    %36 = vector.shape_cast %35 : vector<1x1x1x16x128xf32> to vector<16x128xf32>
    %37 = arith.mulf %34, %36 : vector<16x128xf32>
    %38 = arith.addf %33, %37 : vector<16x128xf32>
    %c4_i32 = arith.constant 4 : i32
    %39 = tpu.dynamic_rotate %28 by %c4_i32 dim 0 : vector<16x128xf32>, i32 -> vector<16x128xf32>
    %c0_26 = arith.constant 0 : index
    %c0_27 = arith.constant 0 : index
    %c1 = arith.constant 1 : index
    %c0_28 = arith.constant 0 : index
    %c0_29 = arith.constant 0 : index
    %40 = vector.load %arg5[%c0_26, %c0_27, %c1, %c0_28, %c0_29] : memref<1x2x9x16x128xf32, #tpu.memory_space<vmem>>, vector<1x1x1x16x128xf32>
    %41 = vector.shape_cast %40 : vector<1x1x1x16x128xf32> to vector<16x128xf32>
    %42 = arith.mulf %39, %41 : vector<16x128xf32>
    %43 = arith.addf %38, %42 : vector<16x128xf32>
    %c3_i32 = arith.constant 3 : i32
    %44 = tpu.dynamic_rotate %28 by %c3_i32 dim 0 : vector<16x128xf32>, i32 -> vector<16x128xf32>
    %c0_30 = arith.constant 0 : index
    %c0_31 = arith.constant 0 : index
    %c2 = arith.constant 2 : index
    %c0_32 = arith.constant 0 : index
    %c0_33 = arith.constant 0 : index
    %45 = vector.load %arg5[%c0_30, %c0_31, %c2, %c0_32, %c0_33] : memref<1x2x9x16x128xf32, #tpu.memory_space<vmem>>, vector<1x1x1x16x128xf32>
    %46 = vector.shape_cast %45 : vector<1x1x1x16x128xf32> to vector<16x128xf32>
    %47 = arith.mulf %44, %46 : vector<16x128xf32>
    %48 = arith.addf %43, %47 : vector<16x128xf32>
    %c1_i32 = arith.constant 1 : i32
    %49 = tpu.dynamic_rotate %28 by %c1_i32 dim 0 : vector<16x128xf32>, i32 -> vector<16x128xf32>
    %c0_34 = arith.constant 0 : index
    %c0_35 = arith.constant 0 : index
    %c3 = arith.constant 3 : index
    %c0_36 = arith.constant 0 : index
    %c0_37 = arith.constant 0 : index
    %50 = vector.load %arg5[%c0_34, %c0_35, %c3, %c0_36, %c0_37] : memref<1x2x9x16x128xf32, #tpu.memory_space<vmem>>, vector<1x1x1x16x128xf32>
    %51 = vector.shape_cast %50 : vector<1x1x1x16x128xf32> to vector<16x128xf32>
    %52 = arith.mulf %49, %51 : vector<16x128xf32>
    %53 = arith.addf %48, %52 : vector<16x128xf32>
    %c15_i32 = arith.constant 15 : i32
    %54 = tpu.dynamic_rotate %28 by %c15_i32 dim 0 : vector<16x128xf32>, i32 -> vector<16x128xf32>
    %c0_38 = arith.constant 0 : index
    %c0_39 = arith.constant 0 : index
    %c5 = arith.constant 5 : index
    %c0_40 = arith.constant 0 : index
    %c0_41 = arith.constant 0 : index
    %55 = vector.load %arg5[%c0_38, %c0_39, %c5, %c0_40, %c0_41] : memref<1x2x9x16x128xf32, #tpu.memory_space<vmem>>, vector<1x1x1x16x128xf32>
    %56 = vector.shape_cast %55 : vector<1x1x1x16x128xf32> to vector<16x128xf32>
    %57 = arith.mulf %54, %56 : vector<16x128xf32>
    %58 = arith.addf %53, %57 : vector<16x128xf32>
    %c13_i32 = arith.constant 13 : i32
    %59 = tpu.dynamic_rotate %28 by %c13_i32 dim 0 : vector<16x128xf32>, i32 -> vector<16x128xf32>
    %c0_42 = arith.constant 0 : index
    %c0_43 = arith.constant 0 : index
    %c6 = arith.constant 6 : index
    %c0_44 = arith.constant 0 : index
    %c0_45 = arith.constant 0 : index
    %60 = vector.load %arg5[%c0_42, %c0_43, %c6, %c0_44, %c0_45] : memref<1x2x9x16x128xf32, #tpu.memory_space<vmem>>, vector<1x1x1x16x128xf32>
    %61 = vector.shape_cast %60 : vector<1x1x1x16x128xf32> to vector<16x128xf32>
    %62 = arith.mulf %59, %61 : vector<16x128xf32>
    %63 = arith.addf %58, %62 : vector<16x128xf32>
    %c12_i32 = arith.constant 12 : i32
    %64 = tpu.dynamic_rotate %28 by %c12_i32 dim 0 : vector<16x128xf32>, i32 -> vector<16x128xf32>
    %c0_46 = arith.constant 0 : index
    %c0_47 = arith.constant 0 : index
    %c7 = arith.constant 7 : index
    %c0_48 = arith.constant 0 : index
    %c0_49 = arith.constant 0 : index
    %65 = vector.load %arg5[%c0_46, %c0_47, %c7, %c0_48, %c0_49] : memref<1x2x9x16x128xf32, #tpu.memory_space<vmem>>, vector<1x1x1x16x128xf32>
    %66 = vector.shape_cast %65 : vector<1x1x1x16x128xf32> to vector<16x128xf32>
    %67 = arith.mulf %64, %66 : vector<16x128xf32>
    %68 = arith.addf %63, %67 : vector<16x128xf32>
    %c11_i32 = arith.constant 11 : i32
    %69 = tpu.dynamic_rotate %28 by %c11_i32 dim 0 : vector<16x128xf32>, i32 -> vector<16x128xf32>
    %c0_50 = arith.constant 0 : index
    %c0_51 = arith.constant 0 : index
    %c8 = arith.constant 8 : index
    %c0_52 = arith.constant 0 : index
    %c0_53 = arith.constant 0 : index
    %70 = vector.load %arg5[%c0_50, %c0_51, %c8, %c0_52, %c0_53] : memref<1x2x9x16x128xf32, #tpu.memory_space<vmem>>, vector<1x1x1x16x128xf32>
    %71 = vector.shape_cast %70 : vector<1x1x1x16x128xf32> to vector<16x128xf32>
    %72 = arith.mulf %69, %71 : vector<16x128xf32>
    %73 = arith.addf %68, %72 : vector<16x128xf32>
    %74 = vector.extract_strided_slice %30 {offsets = [0, 0], sizes = [1, 128], strides = [1, 1]} : vector<6x128xf32> to vector<1x128xf32>
    %75 = vector.broadcast %74 : vector<1x128xf32> to vector<16x128xf32>
    %76 = arith.addf %73, %75 : vector<16x128xf32>
    %cst_54 = arith.constant 5.000000e-01 : f32
    %77 = vector.broadcast %cst_54 : f32 to vector<16x128xf32>
    %78 = arith.mulf %77, %76 : vector<16x128xf32>
    %cst_55 = arith.constant 4.471500e-02 : f32
    %79 = vector.broadcast %cst_55 : f32 to vector<16x128xf32>
    %80 = arith.mulf %79, %76 : vector<16x128xf32>
    %81 = arith.mulf %80, %76 : vector<16x128xf32>
    %82 = arith.mulf %81, %76 : vector<16x128xf32>
    %83 = arith.addf %76, %82 : vector<16x128xf32>
    %cst_56 = arith.constant 0.797884583 : f32
    %84 = vector.broadcast %cst_56 : f32 to vector<16x128xf32>
    %85 = arith.mulf %84, %83 : vector<16x128xf32>
    %86 = math.tanh %85 : vector<16x128xf32>
    %cst_57 = arith.constant 1.000000e+00 : f32
    %87 = vector.broadcast %cst_57 : f32 to vector<16x128xf32>
    %88 = arith.addf %87, %86 : vector<16x128xf32>
    %89 = arith.mulf %78, %88 : vector<16x128xf32>
    %90 = vector.extract_strided_slice %30 {offsets = [1, 0], sizes = [1, 128], strides = [1, 1]} : vector<6x128xf32> to vector<1x128xf32>
    %91 = vector.broadcast %90 : vector<1x128xf32> to vector<16x128xf32>
    %92 = arith.mulf %89, %91 : vector<16x128xf32>
    %93 = vector.extract_strided_slice %30 {offsets = [2, 0], sizes = [1, 128], strides = [1, 1]} : vector<6x128xf32> to vector<1x128xf32>
    %94 = vector.broadcast %93 : vector<1x128xf32> to vector<16x128xf32>
    %95 = arith.addf %92, %94 : vector<16x128xf32>
    %96 = arith.addf %95, %28 : vector<16x128xf32>
    %97 = arith.truncf %96 : vector<16x128xf32> to vector<16x128xbf16>
    %c0_58 = arith.constant 0 : index
    %c0_59 = arith.constant 0 : index
    %c0_60 = arith.constant 0 : index
    %c0_61 = arith.constant 0 : index
    %98 = vector.load %arg6[%c0_58, %c0_59, %c0_60, %c0_61] : memref<1x2x128x128xbf16, #tpu.memory_space<vmem>>, vector<1x1x128x128xbf16>
    %99 = vector.shape_cast %98 : vector<1x1x128x128xbf16> to vector<128x128xbf16>
    %cst_62 = arith.constant dense<0.000000e+00> : vector<16x128xf32>
    %100 = tpu.matmul %97, %99, %cst_62 {dimension_numbers = #tpu.dot_dimension_numbers<[1], [0], [0], [1], [0, 0, 1, 1], [], []>} : vector<16x128xbf16>, vector<128x128xbf16>, vector<16x128xf32> -> vector<16x128xf32>
    %101 = vector.extract_strided_slice %30 {offsets = [3, 0], sizes = [1, 128], strides = [1, 1]} : vector<6x128xf32> to vector<1x128xf32>
    %102 = vector.broadcast %101 : vector<1x128xf32> to vector<16x128xf32>
    %103 = arith.addf %100, %102 : vector<16x128xf32>
    %cst_63 = arith.constant 5.000000e-01 : f32
    %104 = vector.broadcast %cst_63 : f32 to vector<16x128xf32>
    %105 = arith.mulf %104, %103 : vector<16x128xf32>
    %cst_64 = arith.constant 4.471500e-02 : f32
    %106 = vector.broadcast %cst_64 : f32 to vector<16x128xf32>
    %107 = arith.mulf %106, %103 : vector<16x128xf32>
    %108 = arith.mulf %107, %103 : vector<16x128xf32>
    %109 = arith.mulf %108, %103 : vector<16x128xf32>
    %110 = arith.addf %103, %109 : vector<16x128xf32>
    %cst_65 = arith.constant 0.797884583 : f32
    %111 = vector.broadcast %cst_65 : f32 to vector<16x128xf32>
    %112 = arith.mulf %111, %110 : vector<16x128xf32>
    %113 = math.tanh %112 : vector<16x128xf32>
    %cst_66 = arith.constant 1.000000e+00 : f32
    %114 = vector.broadcast %cst_66 : f32 to vector<16x128xf32>
    %115 = arith.addf %114, %113 : vector<16x128xf32>
    %116 = arith.mulf %105, %115 : vector<16x128xf32>
    %117 = vector.extract_strided_slice %30 {offsets = [4, 0], sizes = [1, 128], strides = [1, 1]} : vector<6x128xf32> to vector<1x128xf32>
    %118 = vector.broadcast %117 : vector<1x128xf32> to vector<16x128xf32>
    %119 = arith.mulf %116, %118 : vector<16x128xf32>
    %120 = vector.extract_strided_slice %30 {offsets = [5, 0], sizes = [1, 128], strides = [1, 1]} : vector<6x128xf32> to vector<1x128xf32>
    %121 = vector.broadcast %120 : vector<1x128xf32> to vector<16x128xf32>
    %122 = arith.addf %119, %121 : vector<16x128xf32>
    %c0_67 = arith.constant 0 : index
    %c1_68 = arith.constant 1 : index
    %c0_69 = arith.constant 0 : index
    %c0_70 = arith.constant 0 : index
    %123 = vector.load %arg7[%c0_67, %c1_68, %c0_69, %c0_70] : memref<1x2x6x128xf32, #tpu.memory_space<vmem>>, vector<1x1x6x128xf32>
    %124 = vector.shape_cast %123 : vector<1x1x6x128xf32> to vector<6x128xf32>
    %c0_71 = arith.constant 0 : index
    %c1_72 = arith.constant 1 : index
    %c4_73 = arith.constant 4 : index
    %c0_74 = arith.constant 0 : index
    %c0_75 = arith.constant 0 : index
    %125 = vector.load %arg5[%c0_71, %c1_72, %c4_73, %c0_74, %c0_75] : memref<1x2x9x16x128xf32, #tpu.memory_space<vmem>>, vector<1x1x1x16x128xf32>
    %126 = vector.shape_cast %125 : vector<1x1x1x16x128xf32> to vector<16x128xf32>
    %127 = arith.mulf %122, %126 : vector<16x128xf32>
    %c5_i32_76 = arith.constant 5 : i32
    %128 = tpu.dynamic_rotate %122 by %c5_i32_76 dim 0 : vector<16x128xf32>, i32 -> vector<16x128xf32>
    %c0_77 = arith.constant 0 : index
    %c1_78 = arith.constant 1 : index
    %c0_79 = arith.constant 0 : index
    %c0_80 = arith.constant 0 : index
    %c0_81 = arith.constant 0 : index
    %129 = vector.load %arg5[%c0_77, %c1_78, %c0_79, %c0_80, %c0_81] : memref<1x2x9x16x128xf32, #tpu.memory_space<vmem>>, vector<1x1x1x16x128xf32>
    %130 = vector.shape_cast %129 : vector<1x1x1x16x128xf32> to vector<16x128xf32>
    %131 = arith.mulf %128, %130 : vector<16x128xf32>
    %132 = arith.addf %127, %131 : vector<16x128xf32>
    %c4_i32_82 = arith.constant 4 : i32
    %133 = tpu.dynamic_rotate %122 by %c4_i32_82 dim 0 : vector<16x128xf32>, i32 -> vector<16x128xf32>
    %c0_83 = arith.constant 0 : index
    %c1_84 = arith.constant 1 : index
    %c1_85 = arith.constant 1 : index
    %c0_86 = arith.constant 0 : index
    %c0_87 = arith.constant 0 : index
    %134 = vector.load %arg5[%c0_83, %c1_84, %c1_85, %c0_86, %c0_87] : memref<1x2x9x16x128xf32, #tpu.memory_space<vmem>>, vector<1x1x1x16x128xf32>
    %135 = vector.shape_cast %134 : vector<1x1x1x16x128xf32> to vector<16x128xf32>
    %136 = arith.mulf %133, %135 : vector<16x128xf32>
    %137 = arith.addf %132, %136 : vector<16x128xf32>
    %c3_i32_88 = arith.constant 3 : i32
    %138 = tpu.dynamic_rotate %122 by %c3_i32_88 dim 0 : vector<16x128xf32>, i32 -> vector<16x128xf32>
    %c0_89 = arith.constant 0 : index
    %c1_90 = arith.constant 1 : index
    %c2_91 = arith.constant 2 : index
    %c0_92 = arith.constant 0 : index
    %c0_93 = arith.constant 0 : index
    %139 = vector.load %arg5[%c0_89, %c1_90, %c2_91, %c0_92, %c0_93] : memref<1x2x9x16x128xf32, #tpu.memory_space<vmem>>, vector<1x1x1x16x128xf32>
    %140 = vector.shape_cast %139 : vector<1x1x1x16x128xf32> to vector<16x128xf32>
    %141 = arith.mulf %138, %140 : vector<16x128xf32>
    %142 = arith.addf %137, %141 : vector<16x128xf32>
    %c1_i32_94 = arith.constant 1 : i32
    %143 = tpu.dynamic_rotate %122 by %c1_i32_94 dim 0 : vector<16x128xf32>, i32 -> vector<16x128xf32>
    %c0_95 = arith.constant 0 : index
    %c1_96 = arith.constant 1 : index
    %c3_97 = arith.constant 3 : index
    %c0_98 = arith.constant 0 : index
    %c0_99 = arith.constant 0 : index
    %144 = vector.load %arg5[%c0_95, %c1_96, %c3_97, %c0_98, %c0_99] : memref<1x2x9x16x128xf32, #tpu.memory_space<vmem>>, vector<1x1x1x16x128xf32>
    %145 = vector.shape_cast %144 : vector<1x1x1x16x128xf32> to vector<16x128xf32>
    %146 = arith.mulf %143, %145 : vector<16x128xf32>
    %147 = arith.addf %142, %146 : vector<16x128xf32>
    %c15_i32_100 = arith.constant 15 : i32
    %148 = tpu.dynamic_rotate %122 by %c15_i32_100 dim 0 : vector<16x128xf32>, i32 -> vector<16x128xf32>
    %c0_101 = arith.constant 0 : index
    %c1_102 = arith.constant 1 : index
    %c5_103 = arith.constant 5 : index
    %c0_104 = arith.constant 0 : index
    %c0_105 = arith.constant 0 : index
    %149 = vector.load %arg5[%c0_101, %c1_102, %c5_103, %c0_104, %c0_105] : memref<1x2x9x16x128xf32, #tpu.memory_space<vmem>>, vector<1x1x1x16x128xf32>
    %150 = vector.shape_cast %149 : vector<1x1x1x16x128xf32> to vector<16x128xf32>
    %151 = arith.mulf %148, %150 : vector<16x128xf32>
    %152 = arith.addf %147, %151 : vector<16x128xf32>
    %c13_i32_106 = arith.constant 13 : i32
    %153 = tpu.dynamic_rotate %122 by %c13_i32_106 dim 0 : vector<16x128xf32>, i32 -> vector<16x128xf32>
    %c0_107 = arith.constant 0 : index
    %c1_108 = arith.constant 1 : index
    %c6_109 = arith.constant 6 : index
    %c0_110 = arith.constant 0 : index
    %c0_111 = arith.constant 0 : index
    %154 = vector.load %arg5[%c0_107, %c1_108, %c6_109, %c0_110, %c0_111] : memref<1x2x9x16x128xf32, #tpu.memory_space<vmem>>, vector<1x1x1x16x128xf32>
    %155 = vector.shape_cast %154 : vector<1x1x1x16x128xf32> to vector<16x128xf32>
    %156 = arith.mulf %153, %155 : vector<16x128xf32>
    %157 = arith.addf %152, %156 : vector<16x128xf32>
    %c12_i32_112 = arith.constant 12 : i32
    %158 = tpu.dynamic_rotate %122 by %c12_i32_112 dim 0 : vector<16x128xf32>, i32 -> vector<16x128xf32>
    %c0_113 = arith.constant 0 : index
    %c1_114 = arith.constant 1 : index
    %c7_115 = arith.constant 7 : index
    %c0_116 = arith.constant 0 : index
    %c0_117 = arith.constant 0 : index
    %159 = vector.load %arg5[%c0_113, %c1_114, %c7_115, %c0_116, %c0_117] : memref<1x2x9x16x128xf32, #tpu.memory_space<vmem>>, vector<1x1x1x16x128xf32>
    %160 = vector.shape_cast %159 : vector<1x1x1x16x128xf32> to vector<16x128xf32>
    %161 = arith.mulf %158, %160 : vector<16x128xf32>
    %162 = arith.addf %157, %161 : vector<16x128xf32>
    %c11_i32_118 = arith.constant 11 : i32
    %163 = tpu.dynamic_rotate %122 by %c11_i32_118 dim 0 : vector<16x128xf32>, i32 -> vector<16x128xf32>
    %c0_119 = arith.constant 0 : index
    %c1_120 = arith.constant 1 : index
    %c8_121 = arith.constant 8 : index
    %c0_122 = arith.constant 0 : index
    %c0_123 = arith.constant 0 : index
    %164 = vector.load %arg5[%c0_119, %c1_120, %c8_121, %c0_122, %c0_123] : memref<1x2x9x16x128xf32, #tpu.memory_space<vmem>>, vector<1x1x1x16x128xf32>
    %165 = vector.shape_cast %164 : vector<1x1x1x16x128xf32> to vector<16x128xf32>
    %166 = arith.mulf %163, %165 : vector<16x128xf32>
    %167 = arith.addf %162, %166 : vector<16x128xf32>
    %168 = vector.extract_strided_slice %124 {offsets = [0, 0], sizes = [1, 128], strides = [1, 1]} : vector<6x128xf32> to vector<1x128xf32>
    %169 = vector.broadcast %168 : vector<1x128xf32> to vector<16x128xf32>
    %170 = arith.addf %167, %169 : vector<16x128xf32>
    %cst_124 = arith.constant 5.000000e-01 : f32
    %171 = vector.broadcast %cst_124 : f32 to vector<16x128xf32>
    %172 = arith.mulf %171, %170 : vector<16x128xf32>
    %cst_125 = arith.constant 4.471500e-02 : f32
    %173 = vector.broadcast %cst_125 : f32 to vector<16x128xf32>
    %174 = arith.mulf %173, %170 : vector<16x128xf32>
    %175 = arith.mulf %174, %170 : vector<16x128xf32>
    %176 = arith.mulf %175, %170 : vector<16x128xf32>
    %177 = arith.addf %170, %176 : vector<16x128xf32>
    %cst_126 = arith.constant 0.797884583 : f32
    %178 = vector.broadcast %cst_126 : f32 to vector<16x128xf32>
    %179 = arith.mulf %178, %177 : vector<16x128xf32>
    %180 = math.tanh %179 : vector<16x128xf32>
    %cst_127 = arith.constant 1.000000e+00 : f32
    %181 = vector.broadcast %cst_127 : f32 to vector<16x128xf32>
    %182 = arith.addf %181, %180 : vector<16x128xf32>
    %183 = arith.mulf %172, %182 : vector<16x128xf32>
    %184 = vector.extract_strided_slice %124 {offsets = [1, 0], sizes = [1, 128], strides = [1, 1]} : vector<6x128xf32> to vector<1x128xf32>
    %185 = vector.broadcast %184 : vector<1x128xf32> to vector<16x128xf32>
    %186 = arith.mulf %183, %185 : vector<16x128xf32>
    %187 = vector.extract_strided_slice %124 {offsets = [2, 0], sizes = [1, 128], strides = [1, 1]} : vector<6x128xf32> to vector<1x128xf32>
    %188 = vector.broadcast %187 : vector<1x128xf32> to vector<16x128xf32>
    %189 = arith.addf %186, %188 : vector<16x128xf32>
    %190 = arith.addf %189, %122 : vector<16x128xf32>
    %191 = arith.truncf %190 : vector<16x128xf32> to vector<16x128xbf16>
    %c0_128 = arith.constant 0 : index
    %c1_129 = arith.constant 1 : index
    %c0_130 = arith.constant 0 : index
    %c0_131 = arith.constant 0 : index
    %192 = vector.load %arg6[%c0_128, %c1_129, %c0_130, %c0_131] : memref<1x2x128x128xbf16, #tpu.memory_space<vmem>>, vector<1x1x128x128xbf16>
    %193 = vector.shape_cast %192 : vector<1x1x128x128xbf16> to vector<128x128xbf16>
    %cst_132 = arith.constant dense<0.000000e+00> : vector<16x128xf32>
    %194 = tpu.matmul %191, %193, %cst_132 {dimension_numbers = #tpu.dot_dimension_numbers<[1], [0], [0], [1], [0, 0, 1, 1], [], []>} : vector<16x128xbf16>, vector<128x128xbf16>, vector<16x128xf32> -> vector<16x128xf32>
    %195 = vector.extract_strided_slice %124 {offsets = [3, 0], sizes = [1, 128], strides = [1, 1]} : vector<6x128xf32> to vector<1x128xf32>
    %196 = vector.broadcast %195 : vector<1x128xf32> to vector<16x128xf32>
    %197 = arith.addf %194, %196 : vector<16x128xf32>
    %cst_133 = arith.constant 5.000000e-01 : f32
    %198 = vector.broadcast %cst_133 : f32 to vector<16x128xf32>
    %199 = arith.mulf %198, %197 : vector<16x128xf32>
    %cst_134 = arith.constant 4.471500e-02 : f32
    %200 = vector.broadcast %cst_134 : f32 to vector<16x128xf32>
    %201 = arith.mulf %200, %197 : vector<16x128xf32>
    %202 = arith.mulf %201, %197 : vector<16x128xf32>
    %203 = arith.mulf %202, %197 : vector<16x128xf32>
    %204 = arith.addf %197, %203 : vector<16x128xf32>
    %cst_135 = arith.constant 0.797884583 : f32
    %205 = vector.broadcast %cst_135 : f32 to vector<16x128xf32>
    %206 = arith.mulf %205, %204 : vector<16x128xf32>
    %207 = math.tanh %206 : vector<16x128xf32>
    %cst_136 = arith.constant 1.000000e+00 : f32
    %208 = vector.broadcast %cst_136 : f32 to vector<16x128xf32>
    %209 = arith.addf %208, %207 : vector<16x128xf32>
    %210 = arith.mulf %199, %209 : vector<16x128xf32>
    %211 = vector.extract_strided_slice %124 {offsets = [4, 0], sizes = [1, 128], strides = [1, 1]} : vector<6x128xf32> to vector<1x128xf32>
    %212 = vector.broadcast %211 : vector<1x128xf32> to vector<16x128xf32>
    %213 = arith.mulf %210, %212 : vector<16x128xf32>
    %214 = vector.extract_strided_slice %124 {offsets = [5, 0], sizes = [1, 128], strides = [1, 1]} : vector<6x128xf32> to vector<1x128xf32>
    %215 = vector.broadcast %214 : vector<1x128xf32> to vector<16x128xf32>
    %216 = arith.addf %213, %215 : vector<16x128xf32>
    %cst_137 = arith.constant dense<0.000000e+00> : vector<128xf32>
    %217 = vector.multi_reduction <add>, %216, %cst_137 [0] : vector<16x128xf32> to vector<128xf32>
    %218 = vector.shape_cast %217 : vector<128xf32> to vector<1x128xf32>
    %cst_138 = arith.constant 1.600000e+01 : f32
    %219 = vector.broadcast %cst_138 : f32 to vector<1x128xf32>
    %220 = arith.divf %218, %219 : vector<1x128xf32>
    %c0_139 = arith.constant 0 : index
    %c0_140 = arith.constant 0 : index
    %c0_141 = arith.constant 0 : index
    %c0_142 = arith.constant 0 : index
    %221 = vector.load %arg8[%c0_139, %c0_140, %c0_141, %c0_142] : memref<1x1x1x128xf32, #tpu.memory_space<vmem>>, vector<1x1x1x128xf32>
    %222 = vector.shape_cast %221 : vector<1x1x1x128xf32> to vector<1x128xf32>
    %223 = vector.shape_cast %220 : vector<1x128xf32> to vector<1x1x1x128xf32>
    tpu.vector_store %arg8[%c0_139, %c0_140, %c0_141, %c0_142], %223 {strides = array<i32>} : memref<1x1x1x128xf32, #tpu.memory_space<vmem>>, vector<1x1x1x128xf32>,
    return
  }
  func.func @transform_0(%arg0: i32, %arg1: i32) -> (i32, i32, i32, i32) {
    %c0_i32 = arith.constant 0 : i32
    %c0_i32_0 = arith.constant 0 : i32
    %c0_i32_1 = arith.constant 0 : i32
    return %arg0, %arg1, %c0_i32, %c0_i32_0 : i32, i32, i32, i32
  }
  func.func @transform_1(%arg0: i32, %arg1: i32) -> (i32, i32, i32) {
    %c0_i32 = arith.constant 0 : i32
    %c0_i32_0 = arith.constant 0 : i32
    %c0_i32_1 = arith.constant 0 : i32
    return %arg0, %c0_i32, %c0_i32_0 : i32, i32, i32
  }
  func.func @transform_2(%arg0: i32, %arg1: i32) -> (i32, i32, i32) {
    %c0_i32 = arith.constant 0 : i32
    %c0_i32_0 = arith.constant 0 : i32
    %c0_i32_1 = arith.constant 0 : i32
    return %arg0, %c0_i32, %c0_i32_0 : i32, i32, i32
  }
  func.func @transform_3(%arg0: i32, %arg1: i32) -> (i32, i32, i32, i32, i32) {
    %c0_i32 = arith.constant 0 : i32
    %c0_i32_0 = arith.constant 0 : i32
    %c0_i32_1 = arith.constant 0 : i32
    %c0_i32_2 = arith.constant 0 : i32
    %c0_i32_3 = arith.constant 0 : i32
    return %arg0, %c0_i32, %c0_i32_0, %c0_i32_1, %c0_i32_2 : i32, i32, i32, i32, i32
  }
  func.func @transform_4(%arg0: i32, %arg1: i32) -> (i32, i32, i32, i32) {
    %c0_i32 = arith.constant 0 : i32
    %c0_i32_0 = arith.constant 0 : i32
    %c0_i32_1 = arith.constant 0 : i32
    %c0_i32_2 = arith.constant 0 : i32
    return %arg0, %c0_i32, %c0_i32_0, %c0_i32_1 : i32, i32, i32, i32
  }
  func.func @transform_5(%arg0: i32, %arg1: i32) -> (i32, i32, i32, i32) {
    %c0_i32 = arith.constant 0 : i32
    %c0_i32_0 = arith.constant 0 : i32
    %c0_i32_1 = arith.constant 0 : i32
    %c0_i32_2 = arith.constant 0 : i32
    return %arg0, %c0_i32, %c0_i32_0, %c0_i32_1 : i32, i32, i32, i32
  }
  func.func @transform_6(%arg0: i32, %arg1: i32) -> (i32, i32, i32, i32) {
    %c0_i32 = arith.constant 0 : i32
    %c0_i32_0 = arith.constant 0 : i32
    %c0_i32_1 = arith.constant 0 : i32
    return %arg0, %arg1, %c0_i32, %c0_i32_0 : i32, i32, i32, i32
  }
}

</mosaic_0001>

<llo_original>
// kernel: squeeze.0
$region0: #{squeeze.0}
  %s0 = inlined_call_operand.vmem [shape: bf16[2,1,32,32], index: 0, kind: input, shape index: {}]
  %s1 = inlined_call_operand.vmem [shape: bf16[2,4,8,4,8], index: 1, kind: output, shape index: {}]
  $region1: #{squeeze.0} parent=0
    #allocation0 [shape = 'u8[262144]{0}', space=vmem, size = 0x40000, scoped, tag = 'scoped mem for output reshape']
    #allocation1 [shape = 'u8[32768]{0}', space=vmem, size = 0x8000, scoped, tag = 'scoped mem for input reshape']
    %s3 = ssub.s32 256, 1
    %s4 = scalar_lea.vmem %s0, 28
    %s5 = sshrl.u32 %s3, 1
    %s6 = sor.u32 %s3, %s5
    %s7 = sand.u32 %s6, 85
    %s8 = sshrl.u32 %s7, 1
    %s9 = sor.u32 %s7, %s8
    %s10 = sand.u32 51, %s9
    %s11 = sshrl.u32 %s10, 2
    %s12 = sor.u32 %s10, %s11
    %s13 = sand.u32 15, %s12
    %v14 = vld [vmem:[%s4] sm:%s13]
    %v15 = vunpack.c.l.bf16 %v14
    %v16 = vunpack.c.h.bf16 %v14
    %s17 = scalar_lea.vmem [#allocation1], 56
    %18 = vst [vmem:[%s17] sm:%s3] %v15
    %s19 = scalar_lea.vmem %s0, 24
    %s20 = sshrl.u32 %s3, 1
    %s21 = sor.u32 %s3, %s20
    %s22 = sand.u32 %s21, 85
    %s23 = sshrl.u32 %s22, 1
    %s24 = sor.u32 %s22, %s23
    %s25 = sand.u32 51, %s24
    %s26 = sshrl.u32 %s25, 2
    %s27 = sor.u32 %s25, %s26
    %s28 = sand.u32 15, %s27
    %v29 = vld [vmem:[%s19] sm:%s28]
    %v30 = vunpack.c.l.bf16 %v29
    %v31 = vunpack.c.h.bf16 %v29
    %s32 = scalar_lea.vmem [#allocation1], 48
    %33 = vst [vmem:[%s32] sm:%s3] %v30
    %s34 = scalar_lea.vmem %s0, 20
    %s35 = sshrl.u32 %s3, 1
    %s36 = sor.u32 %s3, %s35
    %s37 = sand.u32 %s36, 85
    %s38 = sshrl.u32 %s37, 1
    %s39 = sor.u32 %s37, %s38
    %s40 = sand.u32 51, %s39
    %s41 = sshrl.u32 %s40, 2
    %s42 = sor.u32 %s40, %s41
    %s43 = sand.u32 15, %s42
    %v44 = vld [vmem:[%s34] sm:%s43]
    %v45 = vunpack.c.l.bf16 %v44
    %v46 = vunpack.c.h.bf16 %v44
    %s47 = scalar_lea.vmem [#allocation1], 40
    %48 = vst [vmem:[%s47] sm:%s3] %v45
    %s49 = scalar_lea.vmem %s0, 16
    %s50 = sshrl.u32 %s3, 1
    %s51 = sor.u32 %s3, %s50
    %s52 = sand.u32 %s51, 85
    %s53 = sshrl.u32 %s52, 1
    %s54 = sor.u32 %s52, %s53
    %s55 = sand.u32 51, %s54
    %s56 = sshrl.u32 %s55, 2
    %s57 = sor.u32 %s55, %s56
    %s58 = sand.u32 15, %s57
    %v59 = vld [vmem:[%s49] sm:%s58]
    %v60 = vunpack.c.l.bf16 %v59
    %v61 = vunpack.c.h.bf16 %v59
    %s62 = scalar_lea.vmem [#allocation1], 32
    %63 = vst [vmem:[%s62] sm:%s3] %v60
    %s64 = scalar_lea.vmem %s0, 12
    %s65 = sshrl.u32 %s3, 1
    %s66 = sor.u32 %s3, %s65
    %s67 = sand.u32 %s66, 85
    %s68 = sshrl.u32 %s67, 1
    %s69 = sor.u32 %s67, %s68
    %s70 = sand.u32 51, %s69
    %s71 = sshrl.u32 %s70, 2
    %s72 = sor.u32 %s70, %s71
    %s73 = sand.u32 15, %s72
    %v74 = vld [vmem:[%s64] sm:%s73]
    %v75 = vunpack.c.l.bf16 %v74
    %v76 = vunpack.c.h.bf16 %v74
    %s77 = scalar_lea.vmem [#allocation1], 24
    %78 = vst [vmem:[%s77] sm:%s3] %v75
    %s79 = scalar_lea.vmem %s0, 8
    %s80 = sshrl.u32 %s3, 1
    %s81 = sor.u32 %s3, %s80
    %s82 = sand.u32 %s81, 85
    %s83 = sshrl.u32 %s82, 1
    %s84 = sor.u32 %s82, %s83
    %s85 = sand.u32 51, %s84
    %s86 = sshrl.u32 %s85, 2
    %s87 = sor.u32 %s85, %s86
    %s88 = sand.u32 15, %s87
    %v89 = vld [vmem:[%s79] sm:%s88]
    %v90 = vunpack.c.l.bf16 %v89
    %v91 = vunpack.c.h.bf16 %v89
    %s92 = scalar_lea.vmem [#allocation1], 16
    %93 = vst [vmem:[%s92] sm:%s3] %v90
    %s94 = scalar_lea.vmem %s0, 4
    %s95 = sshrl.u32 %s3, 1
    %s96 = sor.u32 %s3, %s95
    %s97 = sand.u32 %s96, 85
    %s98 = sshrl.u32 %s97, 1
    %s99 = sor.u32 %s97, %s98
    %s100 = sand.u32 51, %s99
    %s101 = sshrl.u32 %s100, 2
    %s102 = sor.u32 %s100, %s101
    %s103 = sand.u32 15, %s102
    %v104 = vld [vmem:[%s94] sm:%s103]
    %v105 = vunpack.c.l.bf16 %v104
    %v106 = vunpack.c.h.bf16 %v104
    %s107 = scalar_lea.vmem [#allocation1], 8
    %108 = vst [vmem:[%s107] sm:%s3] %v105
    %s109 = sshrl.u32 %s3, 1
    %s110 = sor.u32 %s3, %s109
    %s111 = sand.u32 %s110, 85
    %s112 = sshrl.u32 %s111, 1
    %s113 = sor.u32 %s111, %s112
    %s114 = sand.u32 51, %s113
    %s115 = sshrl.u32 %s114, 2
    %s116 = sor.u32 %s114, %s115
    %s117 = sand.u32 15, %s116
    %v118 = vld [vmem:[%s0] sm:%s117]
    %v119 = vunpack.c.l.bf16 %v118
    %v120 = vunpack.c.h.bf16 %v118
    %121 = vst [vmem:[#allocation1] sm:%s3] %v119
    %v122 = vld [vmem:[#allocation1] sm:$0xff]
    %vm123 = vcmask 64512
    %124 = vst.msk [vmem:[#allocation0] ss:$8 sm:$0xf] %vm123, %v122
    %125 = vst.msk [vmem:[#allocation0] ss:$8 sm:$0xf0] %vm123, %v122
    %s126 = scalar_lea.vmem [#allocation1], 8
    %v127 = vld [vmem:[%s126] sm:$0xff]
    %vm128 = vcmask 64512
    %s129 = scalar_lea.vmem [#allocation0], 64
    %130 = vst.msk [vmem:[%s129] ss:$8 sm:$0xf] %vm128, %v127
    %s131 = scalar_lea.vmem [#allocation0], 64
    %132 = vst.msk [vmem:[%s131] ss:$8 sm:$0xf0] %vm128, %v127
    %s133 = scalar_lea.vmem [#allocation1], 16
    %v134 = vld [vmem:[%s133] sm:$0xff]
    %vm135 = vcmask 64512
    %s136 = scalar_lea.vmem [#allocation0], 128
    %137 = vst.msk [vmem:[%s136] ss:$8 sm:$0xf] %vm135, %v134
    %s138 = scalar_lea.vmem [#allocation0], 128
    %139 = vst.msk [vmem:[%s138] ss:$8 sm:$0xf0] %vm135, %v134
    %s140 = scalar_lea.vmem [#allocation1], 24
    %v141 = vld [vmem:[%s140] sm:$0xff]
    %vm142 = vcmask 64512
    %s143 = scalar_lea.vmem [#allocation0], 192
    %144 = vst.msk [vmem:[%s143] ss:$8 sm:$0xf] %vm142, %v141
    %s145 = scalar_lea.vmem [#allocation0], 192
    %146 = vst.msk [vmem:[%s145] ss:$8 sm:$0xf0] %vm142, %v141
    %s147 = scalar_lea.vmem [#allocation1], 32
    %v148 = vld [vmem:[%s147] sm:$0xff]
    %vm149 = vcmask 64512
    %s150 = scalar_lea.vmem [#allocation0], 256
    %151 = vst.msk [vmem:[%s150] ss:$8 sm:$0xf] %vm149, %v148
    %s152 = scalar_lea.vmem [#allocation0], 256
    %153 = vst.msk [vmem:[%s152] ss:$8 sm:$0xf0] %vm149, %v148
    %s154 = scalar_lea.vmem [#allocation1], 40
    %v155 = vld [vmem:[%s154] sm:$0xff]
    %vm156 = vcmask 64512
    %s157 = scalar_lea.vmem [#allocation0], 320
    %158 = vst.msk [vmem:[%s157] ss:$8 sm:$0xf] %vm156, %v155
    %s159 = scalar_lea.vmem [#allocation0], 320
    %160 = vst.msk [vmem:[%s159] ss:$8 sm:$0xf0] %vm156, %v155
    %s161 = scalar_lea.vmem [#allocation1], 48
    %v162 = vld [vmem:[%s161] sm:$0xff]
    %vm163 = vcmask 64512
    %s164 = scalar_lea.vmem [#allocation0], 384
    %165 = vst.msk [vmem:[%s164] ss:$8 sm:$0xf] %vm163, %v162
    %s166 = scalar_lea.vmem [#allocation0], 384
    %167 = vst.msk [vmem:[%s166] ss:$8 sm:$0xf0] %vm163, %v162
    %s168 = scalar_lea.vmem [#allocation1], 56
    %v169 = vld [vmem:[%s168] sm:$0xff]
    %vm170 = vcmask 64512
    %s171 = scalar_lea.vmem [#allocation0], 448
    %172 = vst.msk [vmem:[%s171] ss:$8 sm:$0xf] %vm170, %v169
    %s173 = scalar_lea.vmem [#allocation0], 448
    %174 = vst.msk [vmem:[%s173] ss:$8 sm:$0xf0] %vm170, %v169
    %v175 = vld [vmem:[#allocation1] sm:$0xff]
    %176 = vrot.lane.b32.xlu0 %v175, 120
    %v177 = vpop.permute.xlu0 %176
    %vm178 = vcmask 64512
    %s179 = scalar_lea.vmem [#allocation0], 1
    %180 = vst.msk [vmem:[%s179] ss:$8 sm:$0xf] %vm178, %v177
    %s181 = scalar_lea.vmem [#allocation0], 1
    %182 = vst.msk [vmem:[%s181] ss:$8 sm:$0xf0] %vm178, %v177
    %s183 = scalar_lea.vmem [#allocation1], 8
    %v184 = vld [vmem:[%s183] sm:$0xff]
    %185 = vrot.lane.b32.xlu0 %v184, 120
    %v186 = vpop.permute.xlu0 %185
    %vm187 = vcmask 64512
    %s188 = scalar_lea.vmem [#allocation0], 65
    %189 = vst.msk [vmem:[%s188] ss:$8 sm:$0xf] %vm187, %v186
    %s190 = scalar_lea.vmem [#allocation0], 65
    %191 = vst.msk [vmem:[%s190] ss:$8 sm:$0xf0] %vm187, %v186
    %s192 = scalar_lea.vmem [#allocation1], 16
    %v193 = vld [vmem:[%s192] sm:$0xff]
    %194 = vrot.lane.b32.xlu0 %v193, 120
    %v195 = vpop.permute.xlu0 %194
    %vm196 = vcmask 64512
    %s197 = scalar_lea.vmem [#allocation0], 129
    %198 = vst.msk [vmem:[%s197] ss:$8 sm:$0xf] %vm196, %v195
    %s199 = scalar_lea.vmem [#allocation0], 129
    %200 = vst.msk [vmem:[%s199] ss:$8 sm:$0xf0] %vm196, %v195
    %s201 = scalar_lea.vmem [#allocation1], 24
    %v202 = vld [vmem:[%s201] sm:$0xff]
    %203 = vrot.lane.b32.xlu0 %v202, 120
    %v204 = vpop.permute.xlu0 %203
    %vm205 = vcmask 64512
    %s206 = scalar_lea.vmem [#allocation0], 193
    %207 = vst.msk [vmem:[%s206] ss:$8 sm:$0xf] %vm205, %v204
    %s208 = scalar_lea.vmem [#allocation0], 193
    %209 = vst.msk [vmem:[%s208] ss:$8 sm:$0xf0] %vm205, %v204
    %s210 = scalar_lea.vmem [#allocation1], 32
    %v211 = vld [vmem:[%s210] sm:$0xff]
    %212 = vrot.lane.b32.xlu0 %v211, 120
    %v213 = vpop.permute.xlu0 %212
    %vm214 = vcmask 64512
    %s215 = scalar_lea.vmem [#allocation0], 257
    %216 = vst.msk [vmem:[%s215] ss:$8 sm:$0xf] %vm214, %v213
    %s217 = scalar_lea.vmem [#allocation0], 257
    %218 = vst.msk [vmem:[%s217] ss:$8 sm:$0xf0] %vm214, %v213
    %s219 = scalar_lea.vmem [#allocation1], 40
    %v220 = vld [vmem:[%s219] sm:$0xff]
    %221 = vrot.lane.b32.xlu0 %v220, 120
    %v222 = vpop.permute.xlu0 %221
    %vm223 = vcmask 64512
    %s224 = scalar_lea.vmem [#allocation0], 321
    %225 = vst.msk [vmem:[%s224] ss:$8 sm:$0xf] %vm223, %v222
    %s226 = scalar_lea.vmem [#allocation0], 321
    %227 = vst.msk [vmem:[%s226] ss:$8 sm:$0xf0] %vm223, %v222
    %s228 = scalar_lea.vmem [#allocation1], 48
    %v229 = vld [vmem:[%s228] sm:$0xff]
    %230 = vrot.lane.b32.xlu0 %v229, 120
    %v231 = vpop.permute.xlu0 %230
    %vm232 = vcmask 64512
    %s233 = scalar_lea.vmem [#allocation0], 385
    %234 = vst.msk [vmem:[%s233] ss:$8 sm:$0xf] %vm232, %v231
    %s235 = scalar_lea.vmem [#allocation0], 385
    %236 = vst.msk [vmem:[%s235] ss:$8 sm:$0xf0] %vm232, %v231
    %s237 = scalar_lea.vmem [#allocation1], 56
    %v238 = vld [vmem:[%s237] sm:$0xff]
    %239 = vrot.lane.b32.xlu0 %v238, 120
    %v240 = vpop.permute.xlu0 %239
    %vm241 = vcmask 64512
    %s242 = scalar_lea.vmem [#allocation0], 449
    %243 = vst.msk [vmem:[%s242] ss:$8 sm:$0xf] %vm241, %v240
    %s244 = scalar_lea.vmem [#allocation0], 449
    %245 = vst.msk [vmem:[%s244] ss:$8 sm:$0xf0] %vm241, %v240
    %v246 = vld [vmem:[#allocation1] sm:$0xff]
    %247 = vrot.lane.b32.xlu0 %v246, 112
    %v248 = vpop.permute.xlu0 %247
    %vm249 = vcmask 64512
    %s250 = scalar_lea.vmem [#allocation0], 2
    %251 = vst.msk [vmem:[%s250] ss:$8 sm:$0xf] %vm249, %v248
    %s252 = scalar_lea.vmem [#allocation0], 2
    %253 = vst.msk [vmem:[%s252] ss:$8 sm:$0xf0] %vm249, %v248
    %s254 = scalar_lea.vmem [#allocation1], 8
    %v255 = vld [vmem:[%s254] sm:$0xff]
    %256 = vrot.lane.b32.xlu0 %v255, 112
    %v257 = vpop.permute.xlu0 %256
    %vm258 = vcmask 64512
    %s259 = scalar_lea.vmem [#allocation0], 66
    %260 = vst.msk [vmem:[%s259] ss:$8 sm:$0xf] %vm258, %v257
    %s261 = scalar_lea.vmem [#allocation0], 66
    %262 = vst.msk [vmem:[%s261] ss:$8 sm:$0xf0] %vm258, %v257
    %s263 = scalar_lea.vmem [#allocation1], 16
    %v264 = vld [vmem:[%s263] sm:$0xff]
    %265 = vrot.lane.b32.xlu0 %v264, 112
    %v266 = vpop.permute.xlu0 %265
    %vm267 = vcmask 64512
    %s268 = scalar_lea.vmem [#allocation0], 130
    %269 = vst.msk [vmem:[%s268] ss:$8 sm:$0xf] %vm267, %v266
    %s270 = scalar_lea.vmem [#allocation0], 130
    %271 = vst.msk [vmem:[%s270] ss:$8 sm:$0xf0] %vm267, %v266
    %s272 = scalar_lea.vmem [#allocation1], 24
    %v273 = vld [vmem:[%s272] sm:$0xff]
    %274 = vrot.lane.b32.xlu0 %v273, 112
    %v275 = vpop.permute.xlu0 %274
    %vm276 = vcmask 64512
    %s277 = scalar_lea.vmem [#allocation0], 194
    %278 = vst.msk [vmem:[%s277] ss:$8 sm:$0xf] %vm276, %v275
    %s279 = scalar_lea.vmem [#allocation0], 194
    %280 = vst.msk [vmem:[%s279] ss:$8 sm:$0xf0] %vm276, %v275
    %s281 = scalar_lea.vmem [#allocation1], 32
    %v282 = vld [vmem:[%s281] sm:$0xff]
    %283 = vrot.lane.b32.xlu0 %v282, 112
    %v284 = vpop.permute.xlu0 %283
    %vm285 = vcmask 64512
    %s286 = scalar_lea.vmem [#allocation0], 258
    %287 = vst.msk [vmem:[%s286] ss:$8 sm:$0xf] %vm285, %v284
    %s288 = scalar_lea.vmem [#allocation0], 258
    %289 = vst.msk [vmem:[%s288] ss:$8 sm:$0xf0] %vm285, %v284
    %s290 = scalar_lea.vmem [#allocation1], 40
    %v291 = vld [vmem:[%s290] sm:$0xff]
    %292 = vrot.lane.b32.xlu0 %v291, 112
    %v293 = vpop.permute.xlu0 %292
    %vm294 = vcmask 64512
    %s295 = scalar_lea.vmem [#allocation0], 322
    %296 = vst.msk [vmem:[%s295] ss:$8 sm:$0xf] %vm294, %v293
    %s297 = scalar_lea.vmem [#allocation0], 322
    %298 = vst.msk [vmem:[%s297] ss:$8 sm:$0xf0] %vm294, %v293
    %s299 = scalar_lea.vmem [#allocation1], 48
    %v300 = vld [vmem:[%s299] sm:$0xff]
    %301 = vrot.lane.b32.xlu0 %v300, 112
    %v302 = vpop.permute.xlu0 %301
    %vm303 = vcmask 64512
    %s304 = scalar_lea.vmem [#allocation0], 386
    %305 = vst.msk [vmem:[%s304] ss:$8 sm:$0xf] %vm303, %v302
    %s306 = scalar_lea.vmem [#allocation0], 386
    %307 = vst.msk [vmem:[%s306] ss:$8 sm:$0xf0] %vm303, %v302
    %s308 = scalar_lea.vmem [#allocation1], 56
    %v309 = vld [vmem:[%s308] sm:$0xff]
    %310 = vrot.lane.b32.xlu0 %v309, 112
    %v311 = vpop.permute.xlu0 %310
    %vm312 = vcmask 64512
    %s313 = scalar_lea.vmem [#allocation0], 450
    %314 = vst.msk [vmem:[%s313] ss:$8 sm:$0xf] %vm312, %v311
    %s315 = scalar_lea.vmem [#allocation0], 450
    %316 = vst.msk [vmem:[%s315] ss:$8 sm:$0xf0] %vm312, %v311
    %v317 = vld [vmem:[#allocation1] sm:$0xff]
    %318 = vrot.lane.b32.xlu0 %v317, 104
    %v319 = vpop.permute.xlu0 %318
    %vm320 = vcmask 64512
    %s321 = scalar_lea.vmem [#allocation0], 3
    %322 = vst.msk [vmem:[%s321] ss:$8 sm:$0xf] %vm320, %v319
    %s323 = scalar_lea.vmem [#allocation0], 3
    %324 = vst.msk [vmem:[%s323] ss:$8 sm:$0xf0] %vm320, %v319
    %s325 = scalar_lea.vmem [#allocation1], 8
    %v326 = vld [vmem:[%s325] sm:$0xff]
    %327 = vrot.lane.b32.xlu0 %v326, 104
    %v328 = vpop.permute.xlu0 %327
    %vm329 = vcmask 64512
    %s330 = scalar_lea.vmem [#allocation0], 67
    %331 = vst.msk [vmem:[%s330] ss:$8 sm:$0xf] %vm329, %v328
    %s332 = scalar_lea.vmem [#allocation0], 67
    %333 = vst.msk [vmem:[%s332] ss:$8 sm:$0xf0] %vm329, %v328
    %s334 = scalar_lea.vmem [#allocation1], 16
    %v335 = vld [vmem:[%s334] sm:$0xff]
    %336 = vrot.lane.b32.xlu0 %v335, 104
    %v337 = vpop.permute.xlu0 %336
    %vm338 = vcmask 64512
    %s339 = scalar_lea.vmem [#allocation0], 131
    %340 = vst.msk [vmem:[%s339] ss:$8 sm:$0xf] %vm338, %v337
    %s341 = scalar_lea.vmem [#allocation0], 131
    %342 = vst.msk [vmem:[%s341] ss:$8 sm:$0xf0] %vm338, %v337
    %s343 = scalar_lea.vmem [#allocation1], 24
    %v344 = vld [vmem:[%s343] sm:$0xff]
    %345 = vrot.lane.b32.xlu0 %v344, 104
    %v346 = vpop.permute.xlu0 %345
    %vm347 = vcmask 64512
    %s348 = scalar_lea.vmem [#allocation0], 195
    %349 = vst.msk [vmem:[%s348] ss:$8 sm:$0xf] %vm347, %v346
    %s350 = scalar_lea.vmem [#allocation0], 195
    %351 = vst.msk [vmem:[%s350] ss:$8 sm:$0xf0] %vm347, %v346
    %s352 = scalar_lea.vmem [#allocation1], 32
    %v353 = vld [vmem:[%s352] sm:$0xff]
    %354 = vrot.lane.b32.xlu0 %v353, 104
    %v355 = vpop.permute.xlu0 %354
    %vm356 = vcmask 64512
    %s357 = scalar_lea.vmem [#allocation0], 259
    %358 = vst.msk [vmem:[%s357] ss:$8 sm:$0xf] %vm356, %v355
    %s359 = scalar_lea.vmem [#allocation0], 259
    %360 = vst.msk [vmem:[%s359] ss:$8 sm:$0xf0] %vm356, %v355
    %s361 = scalar_lea.vmem [#allocation1], 40
    %v362 = vld [vmem:[%s361] sm:$0xff]
    %363 = vrot.lane.b32.xlu0 %v362, 104
    %v364 = vpop.permute.xlu0 %363
    %vm365 = vcmask 64512
    %s366 = scalar_lea.vmem [#allocation0], 323
    %367 = vst.msk [vmem:[%s366] ss:$8 sm:$0xf] %vm365, %v364
    %s368 = scalar_lea.vmem [#allocation0], 323
    %369 = vst.msk [vmem:[%s368] ss:$8 sm:$0xf0] %vm365, %v364
    %s370 = scalar_lea.vmem [#allocation1], 48
    %v371 = vld [vmem:[%s370] sm:$0xff]
    %372 = vrot.lane.b32.xlu0 %v371, 104
    %v373 = vpop.permute.xlu0 %372
    %vm374 = vcmask 64512
    %s375 = scalar_lea.vmem [#allocation0], 387
    %376 = vst.msk [vmem:[%s375] ss:$8 sm:$0xf] %vm374, %v373
    %s377 = scalar_lea.vmem [#allocation0], 387
    %378 = vst.msk [vmem:[%s377] ss:$8 sm:$0xf0] %vm374, %v373
    %s379 = scalar_lea.vmem [#allocation1], 56
    %v380 = vld [vmem:[%s379] sm:$0xff]
    %381 = vrot.lane.b32.xlu0 %v380, 104
    %v382 = vpop.permute.xlu0 %381
    %vm383 = vcmask 64512
    %s384 = scalar_lea.vmem [#allocation0], 451
    %385 = vst.msk [vmem:[%s384] ss:$8 sm:$0xf] %vm383, %v382
    %s386 = scalar_lea.vmem [#allocation0], 451
    %387 = vst.msk [vmem:[%s386] ss:$8 sm:$0xf0] %vm383, %v382
    %s389 = ssub.s32 16, 1
    %v390 = vld [vmem:[#allocation0] sm:%s389]
    %v391 = vpack.c.bf16 0.0, %v390
    %s393 = ssub.s32 4, 1
    %394 = vst [vmem:[%s1] sm:%s393] %v391
    %s395 = scalar_lea.vmem [#allocation0], 8
    %v396 = vld [vmem:[%s395] sm:%s389]
    %v397 = vpack.c.bf16 0.0, %v396
    %s399 = ssub.s32 4, 1
    %s400 = scalar_lea.vmem %s1, 2
    %401 = vst [vmem:[%s400] sm:%s399] %v397
    %s402 = scalar_lea.vmem [#allocation0], 16
    %v403 = vld [vmem:[%s402] sm:%s389]
    %v404 = vpack.c.bf16 0.0, %v403
    %s406 = ssub.s32 4, 1
    %s407 = scalar_lea.vmem %s1, 4
    %408 = vst [vmem:[%s407] sm:%s406] %v404
    %s409 = scalar_lea.vmem [#allocation0], 24
    %v410 = vld [vmem:[%s409] sm:%s389]
    %v411 = vpack.c.bf16 0.0, %v410
    %s413 = ssub.s32 4, 1
    %s414 = scalar_lea.vmem %s1, 6
    %415 = vst [vmem:[%s414] sm:%s413] %v411
    %s416 = scalar_lea.vmem [#allocation0], 32
    %v417 = vld [vmem:[%s416] sm:%s389]
    %v418 = vpack.c.bf16 0.0, %v417
    %s420 = ssub.s32 4, 1
    %s421 = scalar_lea.vmem %s1, 8
    %422 = vst [vmem:[%s421] sm:%s420] %v418
    %s423 = scalar_lea.vmem [#allocation0], 40
    %v424 = vld [vmem:[%s423] sm:%s389]
    %v425 = vpack.c.bf16 0.0, %v424
    %s427 = ssub.s32 4, 1
    %s428 = scalar_lea.vmem %s1, 10
    %429 = vst [vmem:[%s428] sm:%s427] %v425
    %s430 = scalar_lea.vmem [#allocation0], 48
    %v431 = vld [vmem:[%s430] sm:%s389]
    %v432 = vpack.c.bf16 0.0, %v431
    %s434 = ssub.s32 4, 1
    %s435 = scalar_lea.vmem %s1, 12
    %436 = vst [vmem:[%s435] sm:%s434] %v432
    %s437 = scalar_lea.vmem [#allocation0], 56
    %v438 = vld [vmem:[%s437] sm:%s389]
    %v439 = vpack.c.bf16 0.0, %v438
    %s441 = ssub.s32 4, 1
    %s442 = scalar_lea.vmem %s1, 14
    %443 = vst [vmem:[%s442] sm:%s441] %v439
    %s444 = scalar_lea.vmem [#allocation0], 64
    %v445 = vld [vmem:[%s444] sm:%s389]
    %v446 = vpack.c.bf16 0.0, %v445
    %s448 = ssub.s32 4, 1
    %s449 = scalar_lea.vmem %s1, 16
    %450 = vst [vmem:[%s449] sm:%s448] %v446
    %s451 = scalar_lea.vmem [#allocation0], 72
    %v452 = vld [vmem:[%s451] sm:%s389]
    %v453 = vpack.c.bf16 0.0, %v452
    %s455 = ssub.s32 4, 1
    %s456 = scalar_lea.vmem %s1, 18
    %457 = vst [vmem:[%s456] sm:%s455] %v453
    %s458 = scalar_lea.vmem [#allocation0], 80
    %v459 = vld [vmem:[%s458] sm:%s389]
    %v460 = vpack.c.bf16 0.0, %v459
    %s462 = ssub.s32 4, 1
    %s463 = scalar_lea.vmem %s1, 20
    %464 = vst [vmem:[%s463] sm:%s462] %v460
    %s465 = scalar_lea.vmem [#allocation0], 88
    %v466 = vld [vmem:[%s465] sm:%s389]
    %v467 = vpack.c.bf16 0.0, %v466
    %s469 = ssub.s32 4, 1
    %s470 = scalar_lea.vmem %s1, 22
    %471 = vst [vmem:[%s470] sm:%s469] %v467
    %s472 = scalar_lea.vmem [#allocation0], 96
    %v473 = vld [vmem:[%s472] sm:%s389]
    %v474 = vpack.c.bf16 0.0, %v473
    %s476 = ssub.s32 4, 1
    %s477 = scalar_lea.vmem %s1, 24
    %478 = vst [vmem:[%s477] sm:%s476] %v474
    %s479 = scalar_lea.vmem [#allocation0], 104
    %v480 = vld [vmem:[%s479] sm:%s389]
    %v481 = vpack.c.bf16 0.0, %v480
    %s483 = ssub.s32 4, 1
    %s484 = scalar_lea.vmem %s1, 26
    %485 = vst [vmem:[%s484] sm:%s483] %v481
    %s486 = scalar_lea.vmem [#allocation0], 112
    %v487 = vld [vmem:[%s486] sm:%s389]
    %v488 = vpack.c.bf16 0.0, %v487
    %s490 = ssub.s32 4, 1
    %s491 = scalar_lea.vmem %s1, 28
    %492 = vst [vmem:[%s491] sm:%s490] %v488
    %s493 = scalar_lea.vmem [#allocation0], 120
    %v494 = vld [vmem:[%s493] sm:%s389]
    %v495 = vpack.c.bf16 0.0, %v494
    %s497 = ssub.s32 4, 1
    %s498 = scalar_lea.vmem %s1, 30
    %499 = vst [vmem:[%s498] sm:%s497] %v495
    %s500 = scalar_lea.vmem [#allocation0], 128
    %v501 = vld [vmem:[%s500] sm:%s389]
    %v502 = vpack.c.bf16 0.0, %v501
    %s504 = ssub.s32 4, 1
    %s505 = scalar_lea.vmem %s1, 32
    %506 = vst [vmem:[%s505] sm:%s504] %v502
    %s507 = scalar_lea.vmem [#allocation0], 136
    %v508 = vld [vmem:[%s507] sm:%s389]
    %v509 = vpack.c.bf16 0.0, %v508
    %s511 = ssub.s32 4, 1
    %s512 = scalar_lea.vmem %s1, 34
    %513 = vst [vmem:[%s512] sm:%s511] %v509
    %s514 = scalar_lea.vmem [#allocation0], 144
    %v515 = vld [vmem:[%s514] sm:%s389]
    %v516 = vpack.c.bf16 0.0, %v515
    %s518 = ssub.s32 4, 1
    %s519 = scalar_lea.vmem %s1, 36
    %520 = vst [vmem:[%s519] sm:%s518] %v516
    %s521 = scalar_lea.vmem [#allocation0], 152
    %v522 = vld [vmem:[%s521] sm:%s389]
    %v523 = vpack.c.bf16 0.0, %v522
    %s525 = ssub.s32 4, 1
    %s526 = scalar_lea.vmem %s1, 38
    %527 = vst [vmem:[%s526] sm:%s525] %v523
    %s528 = scalar_lea.vmem [#allocation0], 160
    %v529 = vld [vmem:[%s528] sm:%s389]
    %v530 = vpack.c.bf16 0.0, %v529
    %s532 = ssub.s32 4, 1
    %s533 = scalar_lea.vmem %s1, 40
    %534 = vst [vmem:[%s533] sm:%s532] %v530
    %s535 = scalar_lea.vmem [#allocation0], 168
    %v536 = vld [vmem:[%s535] sm:%s389]
    %v537 = vpack.c.bf16 0.0, %v536
    %s539 = ssub.s32 4, 1
    %s540 = scalar_lea.vmem %s1, 42
    %541 = vst [vmem:[%s540] sm:%s539] %v537
    %s542 = scalar_lea.vmem [#allocation0], 176
    %v543 = vld [vmem:[%s542] sm:%s389]
    %v544 = vpack.c.bf16 0.0, %v543
    %s546 = ssub.s32 4, 1
    %s547 = scalar_lea.vmem %s1, 44
    %548 = vst [vmem:[%s547] sm:%s546] %v544
    %s549 = scalar_lea.vmem [#allocation0], 184
    %v550 = vld [vmem:[%s549] sm:%s389]
    %v551 = vpack.c.bf16 0.0, %v550
    %s553 = ssub.s32 4, 1
    %s554 = scalar_lea.vmem %s1, 46
    %555 = vst [vmem:[%s554] sm:%s553] %v551
    %s556 = scalar_lea.vmem [#allocation0], 192
    %v557 = vld [vmem:[%s556] sm:%s389]
    %v558 = vpack.c.bf16 0.0, %v557
    %s560 = ssub.s32 4, 1
    %s561 = scalar_lea.vmem %s1, 48
    %562 = vst [vmem:[%s561] sm:%s560] %v558
    %s563 = scalar_lea.vmem [#allocation0], 200
    %v564 = vld [vmem:[%s563] sm:%s389]
    %v565 = vpack.c.bf16 0.0, %v564
    %s567 = ssub.s32 4, 1
    %s568 = scalar_lea.vmem %s1, 50
    %569 = vst [vmem:[%s568] sm:%s567] %v565
    %s570 = scalar_lea.vmem [#allocation0], 208
    %v571 = vld [vmem:[%s570] sm:%s389]
    %v572 = vpack.c.bf16 0.0, %v571
    %s574 = ssub.s32 4, 1
    %s575 = scalar_lea.vmem %s1, 52
    %576 = vst [vmem:[%s575] sm:%s574] %v572
    %s577 = scalar_lea.vmem [#allocation0], 216
    %v578 = vld [vmem:[%s577] sm:%s389]
    %v579 = vpack.c.bf16 0.0, %v578
    %s581 = ssub.s32 4, 1
    %s582 = scalar_lea.vmem %s1, 54
    %583 = vst [vmem:[%s582] sm:%s581] %v579
    %s584 = scalar_lea.vmem [#allocation0], 224
    %v585 = vld [vmem:[%s584] sm:%s389]
    %v586 = vpack.c.bf16 0.0, %v585
    %s588 = ssub.s32 4, 1
    %s589 = scalar_lea.vmem %s1, 56
    %590 = vst [vmem:[%s589] sm:%s588] %v586
    %s591 = scalar_lea.vmem [#allocation0], 232
    %v592 = vld [vmem:[%s591] sm:%s389]
    %v593 = vpack.c.bf16 0.0, %v592
    %s595 = ssub.s32 4, 1
    %s596 = scalar_lea.vmem %s1, 58
    %597 = vst [vmem:[%s596] sm:%s595] %v593
    %s598 = scalar_lea.vmem [#allocation0], 240
    %v599 = vld [vmem:[%s598] sm:%s389]
    %v600 = vpack.c.bf16 0.0, %v599
    %s602 = ssub.s32 4, 1
    %s603 = scalar_lea.vmem %s1, 60
    %604 = vst [vmem:[%s603] sm:%s602] %v600
    %s605 = scalar_lea.vmem [#allocation0], 248
    %v606 = vld [vmem:[%s605] sm:%s389]
    %v607 = vpack.c.bf16 0.0, %v606
    %s609 = ssub.s32 4, 1
    %s610 = scalar_lea.vmem %s1, 62
    %611 = vst [vmem:[%s610] sm:%s609] %v607
    %s612 = scalar_lea.vmem [#allocation0], 256
    %v613 = vld [vmem:[%s612] sm:%s389]
    %v614 = vpack.c.bf16 0.0, %v613
    %s616 = ssub.s32 4, 1
    %s617 = scalar_lea.vmem %s1, 64
    %618 = vst [vmem:[%s617] sm:%s616] %v614
    %s619 = scalar_lea.vmem [#allocation0], 264
    %v620 = vld [vmem:[%s619] sm:%s389]
    %v621 = vpack.c.bf16 0.0, %v620
    %s623 = ssub.s32 4, 1
    %s624 = scalar_lea.vmem %s1, 66
    %625 = vst [vmem:[%s624] sm:%s623] %v621
    %s626 = scalar_lea.vmem [#allocation0], 272
    %v627 = vld [vmem:[%s626] sm:%s389]
    %v628 = vpack.c.bf16 0.0, %v627
    %s630 = ssub.s32 4, 1
    %s631 = scalar_lea.vmem %s1, 68
    %632 = vst [vmem:[%s631] sm:%s630] %v628
    %s633 = scalar_lea.vmem [#allocation0], 280
    %v634 = vld [vmem:[%s633] sm:%s389]
    %v635 = vpack.c.bf16 0.0, %v634
    %s637 = ssub.s32 4, 1
    %s638 = scalar_lea.vmem %s1, 70
    %639 = vst [vmem:[%s638] sm:%s637] %v635
    %s640 = scalar_lea.vmem [#allocation0], 288
    %v641 = vld [vmem:[%s640] sm:%s389]
    %v642 = vpack.c.bf16 0.0, %v641
    %s644 = ssub.s32 4, 1
    %s645 = scalar_lea.vmem %s1, 72
    %646 = vst [vmem:[%s645] sm:%s644] %v642
    %s647 = scalar_lea.vmem [#allocation0], 296
    %v648 = vld [vmem:[%s647] sm:%s389]
    %v649 = vpack.c.bf16 0.0, %v648
    %s651 = ssub.s32 4, 1
    %s652 = scalar_lea.vmem %s1, 74
    %653 = vst [vmem:[%s652] sm:%s651] %v649
    %s654 = scalar_lea.vmem [#allocation0], 304
    %v655 = vld [vmem:[%s654] sm:%s389]
    %v656 = vpack.c.bf16 0.0, %v655
    %s658 = ssub.s32 4, 1
    %s659 = scalar_lea.vmem %s1, 76
    %660 = vst [vmem:[%s659] sm:%s658] %v656
    %s661 = scalar_lea.vmem [#allocation0], 312
    %v662 = vld [vmem:[%s661] sm:%s389]
    %v663 = vpack.c.bf16 0.0, %v662
    %s665 = ssub.s32 4, 1
    %s666 = scalar_lea.vmem %s1, 78
    %667 = vst [vmem:[%s666] sm:%s665] %v663
    %s668 = scalar_lea.vmem [#allocation0], 320
    %v669 = vld [vmem:[%s668] sm:%s389]
    %v670 = vpack.c.bf16 0.0, %v669
    %s672 = ssub.s32 4, 1
    %s673 = scalar_lea.vmem %s1, 80
    %674 = vst [vmem:[%s673] sm:%s672] %v670
    %s675 = scalar_lea.vmem [#allocation0], 328
    %v676 = vld [vmem:[%s675] sm:%s389]
    %v677 = vpack.c.bf16 0.0, %v676
    %s679 = ssub.s32 4, 1
    %s680 = scalar_lea.vmem %s1, 82
    %681 = vst [vmem:[%s680] sm:%s679] %v677
    %s682 = scalar_lea.vmem [#allocation0], 336
    %v683 = vld [vmem:[%s682] sm:%s389]
    %v684 = vpack.c.bf16 0.0, %v683
    %s686 = ssub.s32 4, 1
    %s687 = scalar_lea.vmem %s1, 84
    %688 = vst [vmem:[%s687] sm:%s686] %v684
    %s689 = scalar_lea.vmem [#allocation0], 344
    %v690 = vld [vmem:[%s689] sm:%s389]
    %v691 = vpack.c.bf16 0.0, %v690
    %s693 = ssub.s32 4, 1
    %s694 = scalar_lea.vmem %s1, 86
    %695 = vst [vmem:[%s694] sm:%s693] %v691
    %s696 = scalar_lea.vmem [#allocation0], 352
    %v697 = vld [vmem:[%s696] sm:%s389]
    %v698 = vpack.c.bf16 0.0, %v697
    %s700 = ssub.s32 4, 1
    %s701 = scalar_lea.vmem %s1, 88
    %702 = vst [vmem:[%s701] sm:%s700] %v698
    %s703 = scalar_lea.vmem [#allocation0], 360
    %v704 = vld [vmem:[%s703] sm:%s389]
    %v705 = vpack.c.bf16 0.0, %v704
    %s707 = ssub.s32 4, 1
    %s708 = scalar_lea.vmem %s1, 90
    %709 = vst [vmem:[%s708] sm:%s707] %v705
    %s710 = scalar_lea.vmem [#allocation0], 368
    %v711 = vld [vmem:[%s710] sm:%s389]
    %v712 = vpack.c.bf16 0.0, %v711
    %s714 = ssub.s32 4, 1
    %s715 = scalar_lea.vmem %s1, 92
    %716 = vst [vmem:[%s715] sm:%s714] %v712
    %s717 = scalar_lea.vmem [#allocation0], 376
    %v718 = vld [vmem:[%s717] sm:%s389]
    %v719 = vpack.c.bf16 0.0, %v718
    %s721 = ssub.s32 4, 1
    %s722 = scalar_lea.vmem %s1, 94
    %723 = vst [vmem:[%s722] sm:%s721] %v719
    %s724 = scalar_lea.vmem [#allocation0], 384
    %v725 = vld [vmem:[%s724] sm:%s389]
    %v726 = vpack.c.bf16 0.0, %v725
    %s728 = ssub.s32 4, 1
    %s729 = scalar_lea.vmem %s1, 96
    %730 = vst [vmem:[%s729] sm:%s728] %v726
    %s731 = scalar_lea.vmem [#allocation0], 392
    %v732 = vld [vmem:[%s731] sm:%s389]
    %v733 = vpack.c.bf16 0.0, %v732
    %s735 = ssub.s32 4, 1
    %s736 = scalar_lea.vmem %s1, 98
    %737 = vst [vmem:[%s736] sm:%s735] %v733
    %s738 = scalar_lea.vmem [#allocation0], 400
    %v739 = vld [vmem:[%s738] sm:%s389]
    %v740 = vpack.c.bf16 0.0, %v739
    %s742 = ssub.s32 4, 1
    %s743 = scalar_lea.vmem %s1, 100
    %744 = vst [vmem:[%s743] sm:%s742] %v740
    %s745 = scalar_lea.vmem [#allocation0], 408
    %v746 = vld [vmem:[%s745] sm:%s389]
    %v747 = vpack.c.bf16 0.0, %v746
    %s749 = ssub.s32 4, 1
    %s750 = scalar_lea.vmem %s1, 102
    %751 = vst [vmem:[%s750] sm:%s749] %v747
    %s752 = scalar_lea.vmem [#allocation0], 416
    %v753 = vld [vmem:[%s752] sm:%s389]
    %v754 = vpack.c.bf16 0.0, %v753
    %s756 = ssub.s32 4, 1
    %s757 = scalar_lea.vmem %s1, 104
    %758 = vst [vmem:[%s757] sm:%s756] %v754
    %s759 = scalar_lea.vmem [#allocation0], 424
    %v760 = vld [vmem:[%s759] sm:%s389]
    %v761 = vpack.c.bf16 0.0, %v760
    %s763 = ssub.s32 4, 1
    %s764 = scalar_lea.vmem %s1, 106
    %765 = vst [vmem:[%s764] sm:%s763] %v761
    %s766 = scalar_lea.vmem [#allocation0], 432
    %v767 = vld [vmem:[%s766] sm:%s389]
    %v768 = vpack.c.bf16 0.0, %v767
    %s770 = ssub.s32 4, 1
    %s771 = scalar_lea.vmem %s1, 108
    %772 = vst [vmem:[%s771] sm:%s770] %v768
    %s773 = scalar_lea.vmem [#allocation0], 440
    %v774 = vld [vmem:[%s773] sm:%s389]
    %v775 = vpack.c.bf16 0.0, %v774
    %s777 = ssub.s32 4, 1
    %s778 = scalar_lea.vmem %s1, 110
    %779 = vst [vmem:[%s778] sm:%s777] %v775
    %s780 = scalar_lea.vmem [#allocation0], 448
    %v781 = vld [vmem:[%s780] sm:%s389]
    %v782 = vpack.c.bf16 0.0, %v781
    %s784 = ssub.s32 4, 1
    %s785 = scalar_lea.vmem %s1, 112
    %786 = vst [vmem:[%s785] sm:%s784] %v782
    %s787 = scalar_lea.vmem [#allocation0], 456
    %v788 = vld [vmem:[%s787] sm:%s389]
    %v789 = vpack.c.bf16 0.0, %v788
    %s791 = ssub.s32 4, 1
    %s792 = scalar_lea.vmem %s1, 114
    %793 = vst [vmem:[%s792] sm:%s791] %v789
    %s794 = scalar_lea.vmem [#allocation0], 464
    %v795 = vld [vmem:[%s794] sm:%s389]
    %v796 = vpack.c.bf16 0.0, %v795
    %s798 = ssub.s32 4, 1
    %s799 = scalar_lea.vmem %s1, 116
    %800 = vst [vmem:[%s799] sm:%s798] %v796
    %s801 = scalar_lea.vmem [#allocation0], 472
    %v802 = vld [vmem:[%s801] sm:%s389]
    %v803 = vpack.c.bf16 0.0, %v802
    %s805 = ssub.s32 4, 1
    %s806 = scalar_lea.vmem %s1, 118
    %807 = vst [vmem:[%s806] sm:%s805] %v803
    %s808 = scalar_lea.vmem [#allocation0], 480
    %v809 = vld [vmem:[%s808] sm:%s389]
    %v810 = vpack.c.bf16 0.0, %v809
    %s812 = ssub.s32 4, 1
    %s813 = scalar_lea.vmem %s1, 120
    %814 = vst [vmem:[%s813] sm:%s812] %v810
    %s815 = scalar_lea.vmem [#allocation0], 488
    %v816 = vld [vmem:[%s815] sm:%s389]
    %v817 = vpack.c.bf16 0.0, %v816
    %s819 = ssub.s32 4, 1
    %s820 = scalar_lea.vmem %s1, 122
    %821 = vst [vmem:[%s820] sm:%s819] %v817
    %s822 = scalar_lea.vmem [#allocation0], 496
    %v823 = vld [vmem:[%s822] sm:%s389]
    %v824 = vpack.c.bf16 0.0, %v823
    %s826 = ssub.s32 4, 1
    %s827 = scalar_lea.vmem %s1, 124
    %828 = vst [vmem:[%s827] sm:%s826] %v824
    %s829 = scalar_lea.vmem [#allocation0], 504
    %v830 = vld [vmem:[%s829] sm:%s389]
    %v831 = vpack.c.bf16 0.0, %v830
    %s833 = ssub.s32 4, 1
    %s834 = scalar_lea.vmem %s1, 126
    %835 = vst [vmem:[%s834] sm:%s833] %v831

</llo_original>
